<compile_context>
chip_gen: v5e
topology: v5e:2x2
jax: 0.10.0
libtpu: 0.0.40
codegen_flags: <defaults>
</compile_context>

<pallas_src>
import functools

import jax
import jax.numpy as jnp
from jax.experimental import pallas as pl
from jax.experimental.pallas import tpu as pltpu


_NEG_SENTINEL = -1e30  # finite "-inf": avoids NaN when a whole row is masked
_VMEM_LIMIT_BYTES = 32 * 1024 * 1024     # safe on v5e/v6e (128 MiB) and v7x (64 MiB)
_VALUES_BLOCK_BUDGET = 8 * 1024 * 1024   # per values buffer (double-buffered by Pallas)


def _round_up(x, m):
    return (x + m - 1) // m * m


def _pick_bt(batch, seq, dim, itemsize):
    """Batch tile: multiple of 8 (32 when tiled, for int8-mask friendliness)."""
    per_row = max(1, seq * dim * itemsize)
    bt = _VALUES_BLOCK_BUDGET // (2 * per_row)       # 2x for double buffering
    bt = max(8, min(int(bt), 256))
    bt = (bt // 32) * 32 if bt >= 32 else 8
    b_pad8 = _round_up(batch, 8)
    if b_pad8 <= bt:
        bt = b_pad8                                   # single block over full batch
    return bt


def _attention_kernel(q_ref, v_ref, m_ref, out_ref, w_ref, *, scale):
    # q_ref : (1, D)       shared learned query (resident across grid steps)
    # v_ref : (BT, S, D)   values tile for this batch block
    # m_ref : (BT, S)      int8 padding mask (nonzero -> masked)
    # out_ref : (BT, D)    attention output
    # w_ref   : (BT, S)    softmax attention weights
    q = q_ref[...].astype(jnp.float32) * scale        # fold 1/sqrt(D) once per block
    v = v_ref[...].astype(jnp.float32)                 # (BT, S, D) f32 compute
    mask = m_ref[...].astype(jnp.float32)               # (BT, S)

    # scores[b, s] = sum_d v[b, s, d] * q[d]   (VPU multiply + lane reduce)
    scores = jnp.sum(v * q[None, :, :], axis=-1)        # (BT, S)

    # masked_fill with a large finite negative (exp underflows to exactly 0)
    scores = jnp.where(mask != 0.0, jnp.float32(_NEG_SENTINEL), scores)

    # numerically stable softmax over the sequence axis
    m_max = jnp.max(scores, axis=-1, keepdims=True)      # (BT, 1)
    e = jnp.exp(scores - m_max)
    denom = jnp.sum(e, axis=-1, keepdims=True)
    w = e / denom                                        # (BT, S)

    # out[b, d] = sum_s w[b, s] * v[b, s, d]   (VPU multiply + sublane reduce)
    out = jnp.sum(w[:, :, None] * v, axis=1)             # (BT, D)

    out_ref[...] = out.astype(out_ref.dtype)
    w_ref[...] = w.astype(w_ref.dtype)


def attention_forward(query, values, padding_mask):
    """query: (1, 1, D); values: (B, S, D); padding_mask: (B, S) bool/int.

    Returns (output (B, D), weights (B, 1, S)), matching the PyTorch module.
    """
    B, S, D = values.shape
    scale = 1.0 / float(D) ** 0.5
    out_dtype = values.dtype

    bt = _pick_bt(B, S, D, values.dtype.itemsize)
    b_pad = _round_up(B, bt)

    q2d = query.reshape(1, D).astype(jnp.float32)
    mask_i8 = padding_mask.astype(jnp.int8)

    values_p = values
    mask_p = mask_i8
    if b_pad != B:
        pad = b_pad - B
        values_p = jnp.concatenate(
            [values, jnp.zeros((pad, S, D), values.dtype)], axis=0)
        # padded rows: fully masked -> uniform weights, zero output; sliced off below
        mask_p = jnp.concatenate(
            [mask_i8, jnp.ones((pad, S), jnp.int8)], axis=0)

    kernel = functools.partial(_attention_kernel, scale=scale)

    out, weights = pl.pallas_call(
        kernel,
        out_shape=(
            jax.ShapeDtypeStruct((b_pad, D), out_dtype),
            jax.ShapeDtypeStruct((b_pad, S), out_dtype),
        ),
        grid_spec=pltpu.PrefetchScalarGridSpec(
            num_scalar_prefetch=0,
            grid=(b_pad // bt,),
            in_specs=[
                pl.BlockSpec((1, D), lambda i: (0, 0)),        # shared query
                pl.BlockSpec((bt, S, D), lambda i: (i, 0, 0)),  # values tile
                pl.BlockSpec((bt, S), lambda i: (i, 0)),        # int8 mask tile
            ],
            out_specs=[
                pl.BlockSpec((bt, D), lambda i: (i, 0)),
                pl.BlockSpec((bt, S), lambda i: (i, 0)),
            ],
        ),
        compiler_params=pltpu.CompilerParams(
            dimension_semantics=("parallel",),      # batch blocks split across TCs (v7x)
            vmem_limit_bytes=_VMEM_LIMIT_BYTES,
        ),
    )(q2d, values_p, mask_p)

    return out[:B], weights[:B].reshape(B, 1, S)


def _reference(query, values, padding_mask):
    B, S, D = values.shape
    scale = 1.0 / float(D) ** 0.5
    q = jnp.broadcast_to(query.astype(jnp.float32), (B, 1, D))
    w = jnp.einsum("bqd,bsd->bqs", q, values.astype(jnp.float32)) * scale
    w = jnp.where(padding_mask[:, None, :], -jnp.inf, w)
    w = jax.nn.softmax(w, axis=-1)
    out = jnp.einsum("bqs,bsd->bqd", w, values.astype(jnp.float32))[:, 0, :]
    return out.astype(values.dtype), w.astype(values.dtype)


if __name__ == "__main__":
    key = jax.random.PRNGKey(0)
    k_q, k_v = jax.random.split(key)

    B, S, D = 2, 8, 32

    # Deterministic "parameter" init (nn.Parameter(torch.randn(1, 1, D)) shape).
    query = jax.random.normal(k_q, (1, 1, D), dtype=jnp.float32)
    values = jax.random.normal(k_v, (B, S, D), dtype=jnp.float32)
    # Mask out the last two positions of batch 1, nothing in batch 0.
    padding_mask = jnp.array(
        [[False] * S, [False] * (S - 2) + [True, True]], dtype=jnp.bool_
    )

    out, weights = attention_forward(query, values, padding_mask)
    out = jax.block_until_ready(out)
    weights = jax.block_until_ready(weights)

    ref_out, ref_w = _reference(query, values, padding_mask)
    assert out.shape == (B, D) and weights.shape == (B, 1, S)
    assert jnp.allclose(out, ref_out, atol=1e-5, rtol=1e-5)
    assert jnp.allclose(weights, ref_w, atol=1e-5, rtol=1e-5)

    print("KERNEL_OK")
</pallas_src>

<mosaic_0001>
module attributes {stable_mosaic.version = 11 : i64} {
  func.func @_attention_kernel(%arg0: i32, %arg1: memref<1x32xf32, #tpu.memory_space<vmem>>, %arg2: memref<8x8x32xf32, #tpu.memory_space<vmem>>, %arg3: memref<8x8xi8, #tpu.memory_space<vmem>>, %arg4: memref<8x32xf32, #tpu.memory_space<vmem>>, %arg5: memref<8x8xf32, #tpu.memory_space<vmem>>) attributes {dimension_semantics = [#tpu.dimension_semantics<parallel>], iteration_bounds = array<i64: 1>, scalar_prefetch = 0 : i64, scratch_operands = 0 : i64, tpu.core_type = #tpu.core_type<tc>, window_params = [{pipeline_mode = #tpu.pipeline_mode<synchronous>, transform_indices = @transform_0, window_bounds = array<i64: 1, 32>}, {transform_indices = @transform_1, window_bounds = array<i64: 8, 8, 32>}, {transform_indices = @transform_2, window_bounds = array<i64: 8, 8>}, {transform_indices = @transform_3, window_bounds = array<i64: 8, 32>}, {transform_indices = @transform_4, window_bounds = array<i64: 8, 8>}]} {
    %c0 = arith.constant 0 : index
    %c0_0 = arith.constant 0 : index
    %0 = vector.load %arg1[%c0, %c0_0] : memref<1x32xf32, #tpu.memory_space<vmem>>, vector<1x32xf32>
    %cst = arith.constant 0.176776692 : f32
    %1 = vector.broadcast %cst : f32 to vector<1x32xf32>
    %2 = arith.mulf %0, %1 : vector<1x32xf32>
    %c0_1 = arith.constant 0 : index
    %c0_2 = arith.constant 0 : index
    %c0_3 = arith.constant 0 : index
    %3 = vector.load %arg2[%c0_1, %c0_2, %c0_3] : memref<8x8x32xf32, #tpu.memory_space<vmem>>, vector<8x8x32xf32>
    %c0_4 = arith.constant 0 : index
    %c0_5 = arith.constant 0 : index
    %4 = vector.load %arg3[%c0_4, %c0_5] : memref<8x8xi8, #tpu.memory_space<vmem>>, vector<8x8xi8>
    %5 = arith.sitofp %4 : vector<8x8xi8> to vector<8x8xf32>
    %6 = vector.shape_cast %2 : vector<1x32xf32> to vector<1x1x32xf32>
    %7 = vector.broadcast %6 : vector<1x1x32xf32> to vector<8x8x32xf32>
    %8 = arith.mulf %3, %7 : vector<8x8x32xf32>
    %cst_6 = arith.constant dense<0.000000e+00> : vector<8x8xf32>
    %9 = vector.multi_reduction <add>, %8, %cst_6 [2] : vector<8x8x32xf32> to vector<8x8xf32>
    %cst_7 = arith.constant 0.000000e+00 : f32
    %10 = vector.broadcast %cst_7 : f32 to vector<8x8xf32>
    %11 = arith.cmpf one, %5, %10 : vector<8x8xf32>
    %cst_8 = arith.constant -1.000000e+30 : f32
    %12 = vector.broadcast %cst_8 : f32 to vector<8x8xf32>
    %13 = arith.select %11, %12, %9 : vector<8x8xi1>, vector<8x8xf32>
    %cst_9 = arith.constant dense<0xFF800000> : vector<8xf32>
    %14 = vector.multi_reduction <maximumf>, %13, %cst_9 [1] : vector<8x8xf32> to vector<8xf32>
    %15 = vector.shape_cast %14 : vector<8xf32> to vector<8x1xf32>
    %16 = vector.broadcast %15 : vector<8x1xf32> to vector<8x8xf32>
    %17 = arith.subf %13, %16 : vector<8x8xf32>
    %18 = math.exp %17 : vector<8x8xf32>
    %cst_10 = arith.constant dense<0.000000e+00> : vector<8xf32>
    %19 = vector.multi_reduction <add>, %18, %cst_10 [1] : vector<8x8xf32> to vector<8xf32>
    %20 = vector.shape_cast %19 : vector<8xf32> to vector<8x1xf32>
    %21 = vector.broadcast %20 : vector<8x1xf32> to vector<8x8xf32>
    %22 = arith.divf %18, %21 : vector<8x8xf32>
    %23 = vector.shape_cast %22 : vector<8x8xf32> to vector<8x8x1xf32>
    %24 = vector.broadcast %23 : vector<8x8x1xf32> to vector<8x8x32xf32>
    %25 = arith.mulf %24, %3 : vector<8x8x32xf32>
    %cst_11 = arith.constant dense<0.000000e+00> : vector<8x32xf32>
    %26 = vector.multi_reduction <add>, %25, %cst_11 [1] : vector<8x8x32xf32> to vector<8x32xf32>
    %c0_12 = arith.constant 0 : index
    %c0_13 = arith.constant 0 : index
    %27 = vector.load %arg4[%c0_12, %c0_13] : memref<8x32xf32, #tpu.memory_space<vmem>>, vector<8x32xf32>
    tpu.vector_store %arg4[%c0_12, %c0_13], %26 {strides = array<i32>} : memref<8x32xf32, #tpu.memory_space<vmem>>, vector<8x32xf32>,
    %c0_14 = arith.constant 0 : index
    %c0_15 = arith.constant 0 : index
    %28 = vector.load %arg5[%c0_14, %c0_15] : memref<8x8xf32, #tpu.memory_space<vmem>>, vector<8x8xf32>
    tpu.vector_store %arg5[%c0_14, %c0_15], %22 {strides = array<i32>} : memref<8x8xf32, #tpu.memory_space<vmem>>, vector<8x8xf32>,
    return
  }
  func.func @transform_0(%arg0: i32) -> (i32, i32) {
    %c0_i32 = arith.constant 0 : i32
    %c0_i32_0 = arith.constant 0 : i32
    %c0_i32_1 = arith.constant 0 : i32
    return %c0_i32, %c0_i32_0 : i32, i32
  }
  func.func @transform_1(%arg0: i32) -> (i32, i32, i32) {
    %c0_i32 = arith.constant 0 : i32
    %c0_i32_0 = arith.constant 0 : i32
    %c0_i32_1 = arith.constant 0 : i32
    return %arg0, %c0_i32, %c0_i32_0 : i32, i32, i32
  }
  func.func @transform_2(%arg0: i32) -> (i32, i32) {
    %c0_i32 = arith.constant 0 : i32
    %c0_i32_0 = arith.constant 0 : i32
    return %arg0, %c0_i32 : i32, i32
  }
  func.func @transform_3(%arg0: i32) -> (i32, i32) {
    %c0_i32 = arith.constant 0 : i32
    %c0_i32_0 = arith.constant 0 : i32
    return %arg0, %c0_i32 : i32, i32
  }
  func.func @transform_4(%arg0: i32) -> (i32, i32) {
    %c0_i32 = arith.constant 0 : i32
    %c0_i32_0 = arith.constant 0 : i32
    return %arg0, %c0_i32 : i32, i32
  }
}

</mosaic_0001>

<llo_original>
// kernel: tpu_custom_call.1
$region0: #{tpu_custom_call.1}
  #allocation0 [shape = 'u32[]', space=smem, size = 0x4, offset = 0x4, fixed_abs, tag = 'smem constant byte address 0x4 - core index']
  #allocation1 [shape = 'u32[72,128]{1,0:T(1,128)}', space=vmem, size = 0x9000, scoped, tag = 'internal scratch']
  %s0 = inlined_call_operand.hbm [shape: f32[1,32], index: 0, kind: input, shape index: {}]
  %s1 = inlined_call_operand.hbm [shape: f32[8,8,32], index: 1, kind: input, shape index: {}]
  %s2 = inlined_call_operand.hbm [shape: s8[8,8], index: 2, kind: input, shape index: {}]
  %s3 = inlined_call_operand.hbm [shape: f32[8,32], index: 3, kind: output, shape index: {0}]
  %s4 = inlined_call_operand.hbm [shape: f32[8,8], index: 4, kind: output, shape index: {1}]
  %5 = xla_tuple %s3, %s4
  %s6 = sld [smem:[#allocation0]]
  $region42: #{tpu_custom_call.1} parent=0
    _
  %s8 = ssub.s32 1, %s6
  %s9 = scalar_select 0, %s8, %s6
  $region1: #{tpu_custom_call.1} parent=0
    #allocation2 [shape = 'u8[512]{0}', space=vmem, size = 0x400, scoped, tag = 'input window, operand 0, single buffered']
    #allocation3 [shape = 's32[1]{0}', space=sflag, size = 0x4, scoped, tag = 'scoped memory for tpu_custom_call.1']
    #allocation4 [shape = 's32[1]{0}', space=sflag, size = 0x4, scoped, tag = 'scoped memory for tpu_custom_call.1']
    #allocation5 [shape = 'u8[32768]{0}', space=vmem, size = 0x8000, scoped, tag = 'input window, operand 1, single buffered']
    #allocation6 [shape = 's32[1]{0}', space=sflag, size = 0x4, scoped, tag = 'scoped memory for tpu_custom_call.1']
    #allocation7 [shape = 'u8[1024]{0}', space=vmem, size = 0x400, scoped, tag = 'input window, operand 2, single buffered']
    #allocation8 [shape = 'u8[4096]{0}', space=vmem, size = 0x1000, scoped, tag = 'output window, operand 0, single buffered']
    #allocation9 [shape = 'u8[4096]{0}', space=vmem, size = 0x1000, scoped, tag = 'output window, operand 1, single buffered']
    #allocation10 [shape = 's32[1]{0}', space=sflag, size = 0x4, scoped, tag = 'scoped memory for tpu_custom_call.1']
    %10 = vsyncpa [#allocation3], 0
    %11 = vsyncpa [#allocation6], 0
    %12 = vsyncpa [#allocation4], 0
    %13 = vsyncpa [#allocation10], 0
    // Predicated region
    $region2: #{tpu_custom_call.1} parent=1 // pred_check
      _
    $region3: #{tpu_custom_call.1} parent=1 // pred_check_branch
      %15 = sbr.rel (0) target = $region5
    $region4: #{tpu_custom_call.1} parent=1 // pred_region
      %17 = vsyncadd [#allocation3], 0
      %s19 = sshll.u32 %s0, 4
      %s20 = int_to_ptr.hbm [resolvable:$true] %s19
      %s21 = sshll.u32 [#allocation2], 4
      %s22 = int_to_ptr.vmem [resolvable:$true] %s21
      %24 = dma.hbm_to_vmem [thread:$0]  %s20, 16, %s22, [#allocation3]
    $region5: #{tpu_custom_call.1} parent=1 // pred_fallthru
      _
    // Predicated region
    $region6: #{tpu_custom_call.1} parent=1 // pred_check
      _
    $region7: #{tpu_custom_call.1} parent=1 // pred_check_branch
      %26 = sbr.rel (0) target = $region9
    $region8: #{tpu_custom_call.1} parent=1 // pred_region
      %28 = vsyncadd [#allocation6], 0
      %s29 = sshll.u32 %s1, 4
      %s30 = int_to_ptr.hbm [resolvable:$true] %s29
      %s31 = sshll.u32 [#allocation5], 4
      %s32 = int_to_ptr.vmem [resolvable:$true] %s31
      %37 = dma.hbm_to_vmem [thread:$0]  %s30, 1024, %s32, [#allocation6], 128, 128, 8
    $region9: #{tpu_custom_call.1} parent=1 // pred_fallthru
      _
    // Predicated region
    $region10: #{tpu_custom_call.1} parent=1 // pred_check
      _
    $region11: #{tpu_custom_call.1} parent=1 // pred_check_branch
      %39 = sbr.rel (0) target = $region13
    $region12: #{tpu_custom_call.1} parent=1 // pred_region
      %41 = vsyncadd [#allocation6], 0
      %s43 = sshll.u32 %s2, 4
      %s44 = int_to_ptr.hbm [resolvable:$true] %s43
      %s45 = sshll.u32 [#allocation7], 4
      %s46 = int_to_ptr.vmem [resolvable:$true] %s45
      %48 = dma.hbm_to_vmem [thread:$0]  %s44, 32, %s46, [#allocation6]
    $region13: #{tpu_custom_call.1} parent=1 // pred_fallthru
      _
    // Predicated region
    $region14: #{tpu_custom_call.1} parent=1 // pred_check
      _
    $region15: #{tpu_custom_call.1} parent=1 // pred_check_branch
      %50 = sbr.rel (0) target = $region17
    $region16: #{tpu_custom_call.1} parent=1 // pred_region
      %52 = dma.done [#allocation3], 16
    $region17: #{tpu_custom_call.1} parent=1 // pred_fallthru
      _
    // Predicated region
    $region18: #{tpu_custom_call.1} parent=1 // pred_check
      _
    $region19: #{tpu_custom_call.1} parent=1 // pred_check_branch
      %54 = sbr.rel (0) target = $region21
    $region20: #{tpu_custom_call.1} parent=1 // pred_region
      %56 = dma.done [#allocation6], 1024
    $region21: #{tpu_custom_call.1} parent=1 // pred_fallthru
      _
    // Predicated region
    $region22: #{tpu_custom_call.1} parent=1 // pred_check
      _
    $region23: #{tpu_custom_call.1} parent=1 // pred_check_branch
      %58 = sbr.rel (0) target = $region25
    $region24: #{tpu_custom_call.1} parent=1 // pred_region
      %60 = dma.done [#allocation6], 32
    $region25: #{tpu_custom_call.1} parent=1 // pred_fallthru
      _
    %v61 = vld [vmem:[#allocation2] sm:$0x1]
    %v62 = vmul.f32 %v61, 0.17677669
    %v63 = vld [vmem:[#allocation5] sm:$0xff]
    %v64 = vld [vmem:[#allocation5 + $0x8] sm:$0xff]
    %v65 = vld [vmem:[#allocation5 + $0x10] sm:$0xff]
    %v66 = vld [vmem:[#allocation5 + $0x18] sm:$0xff]
    %v67 = vld [vmem:[#allocation5 + $0x20] sm:$0xff]
    %v68 = vld [vmem:[#allocation5 + $0x28] sm:$0xff]
    %v69 = vld [vmem:[#allocation5 + $0x30] sm:$0xff]
    %v70 = vld [vmem:[#allocation5 + $0x38] sm:$0xff]
    %v71 = vld [vmem:[#allocation7] sm:$0x3]
    %v72 = vunpack.c.0.s8 %v71
    %v73 = vcvt.s32.f32 %v72
    %v75 = vperm.slane %v62, 0
    %v77 = vmul.f32 %v63, %v75
    %v78 = vmul.f32 %v64, %v75
    %v79 = vmul.f32 %v65, %v75
    %v80 = vmul.f32 %v66, %v75
    %v81 = vmul.f32 %v67, %v75
    %v82 = vmul.f32 %v68, %v75
    %v83 = vmul.f32 %v69, %v75
    %v84 = vmul.f32 %v70, %v75
    %vm85 = vcmask 261120
    %v86 = vsel %vm85, %v77, 0.0
    %87 = vadd.xlane.f32.xlu0 %v86
    %v88 = vpop.xlane.xlu0 %87
    %v89 = vsel %vm85, %v78, 0.0
    %90 = vadd.xlane.f32.xlu0 %v89
    %v91 = vpop.xlane.xlu0 %90
    %v92 = vsel %vm85, %v79, 0.0
    %93 = vadd.xlane.f32.xlu0 %v92
    %v94 = vpop.xlane.xlu0 %93
    %v95 = vsel %vm85, %v80, 0.0
    %96 = vadd.xlane.f32.xlu0 %v95
    %v97 = vpop.xlane.xlu0 %96
    %v98 = vsel %vm85, %v81, 0.0
    %99 = vadd.xlane.f32.xlu0 %v98
    %v100 = vpop.xlane.xlu0 %99
    %v101 = vsel %vm85, %v82, 0.0
    %102 = vadd.xlane.f32.xlu0 %v101
    %v103 = vpop.xlane.xlu0 %102
    %v104 = vsel %vm85, %v83, 0.0
    %105 = vadd.xlane.f32.xlu0 %v104
    %v106 = vpop.xlane.xlu0 %105
    %v107 = vsel %vm85, %v84, 0.0
    %108 = vadd.xlane.f32.xlu0 %v107
    %v109 = vpop.xlane.xlu0 %108
    %vm110 = vcmp.ne.f32.partialorder %v73, 0.0
    %v119 = vlaneseq
    %v120 = vand.u32 %v119, 127
    %v121 = vperm.slane %v88, %v120
    %v122 = vperm.slane %v91, %v120
    %v123 = vperm.slane %v94, %v120
    %v124 = vperm.slane %v97, %v120
    %v125 = vperm.slane %v100, %v120
    %v126 = vperm.slane %v103, %v120
    %v127 = vperm.slane %v106, %v120
    %v128 = vperm.slane %v109, %v120
    %vm129 = vcmask 1041409
    %v130 = vsel %vm129, %v122, %v121
    %vm131 = vcmask 1042434
    %v132 = vsel %vm131, %v123, %v130
    %vm133 = vcmask 1043459
    %v134 = vsel %vm133, %v124, %v132
    %vm135 = vcmask 1044484
    %v136 = vsel %vm135, %v125, %v134
    %vm137 = vcmask 1045509
    %v138 = vsel %vm137, %v126, %v136
    %vm139 = vcmask 1046534
    %v140 = vsel %vm139, %v127, %v138
    %vm141 = vcmask 1047559
    %v142 = vsel %vm141, %v128, %v140
    %v144 = vsel %vm110, -1e+30, %v142
    %vm145 = vcmask 64512
    %v146 = vsel %vm145, %v144, -inf
    %147 = vmax.xlane.f32.xlu0 %v146
    %v148 = vpop.xlane.xlu0 %147
    %v149 = vsub.f32 %v144, %v148
    %v150 = vmul.f32 %v149, 1.442695
    %v151 = vpow.pop %v150
    %v152 = vsel %vm145, %v151, 0.0
    %153 = vadd.xlane.f32.xlu0 %v152
    %v154 = vpop.xlane.xlu0 %153
    %v155 = vrcp.pop %v154
    %v156 = vmul.f32 %v154, %v155
    %v157 = vsub.f32 1.0, %v156
    %v158 = vmul.f32 %v155, %v157
    %v159 = vadd.f32 %v155, %v158
    %vm160 = vweird.f32 %v154
    %vm161 = vweird.f32 %v155
    %vm162 = vmor %vm160, %vm161
    %v163 = vsel %vm162, %v155, %v159
    %v164 = vand.u32 2147483647, %v154
    %vm165 = vcmp.eq.f32.partialorder %v164, 8.507059e+37
    %v166 = vand.u32 %v154, 2147483648
    %v167 = vor.u32 1.1754944e-38, %v166
    %v168 = vsel %vm165, %v167, %v163
    %v169 = vmul.f32 %v151, %v168
    %v170 = vperm.slane %v169, 0
    %v171 = vlaneseq
    %v172 = vshrl.u32 %v171, 7
    %174 = vset.pattern.permute.xlu0 %v172
    %175 = vperm.xlu0 %174, %v170
    %v176 = vpop.permute.xlu0 %175
    %v177 = vperm.slane %v169, 1
    %v178 = vlaneseq
    %v179 = vshrl.u32 %v178, 7
    %181 = vset.pattern.permute.xlu0 %v179
    %182 = vperm.xlu0 %181, %v177
    %v183 = vpop.permute.xlu0 %182
    %v184 = vperm.slane %v169, 2
    %v185 = vlaneseq
    %v186 = vshrl.u32 %v185, 7
    %188 = vset.pattern.permute.xlu0 %v186
    %189 = vperm.xlu0 %188, %v184
    %v190 = vpop.permute.xlu0 %189
    %v191 = vperm.slane %v169, 3
    %v192 = vlaneseq
    %v193 = vshrl.u32 %v192, 7
    %195 = vset.pattern.permute.xlu0 %v193
    %196 = vperm.xlu0 %195, %v191
    %v197 = vpop.permute.xlu0 %196
    %v198 = vperm.slane %v169, 4
    %v199 = vlaneseq
    %v200 = vshrl.u32 %v199, 7
    %202 = vset.pattern.permute.xlu0 %v200
    %203 = vperm.xlu0 %202, %v198
    %v204 = vpop.permute.xlu0 %203
    %v205 = vperm.slane %v169, 5
    %v206 = vlaneseq
    %v207 = vshrl.u32 %v206, 7
    %209 = vset.pattern.permute.xlu0 %v207
    %210 = vperm.xlu0 %209, %v205
    %v211 = vpop.permute.xlu0 %210
    %v212 = vperm.slane %v169, 6
    %v213 = vlaneseq
    %v214 = vshrl.u32 %v213, 7
    %216 = vset.pattern.permute.xlu0 %v214
    %217 = vperm.xlu0 %216, %v212
    %v218 = vpop.permute.xlu0 %217
    %v219 = vperm.slane %v169, 7
    %v220 = vlaneseq
    %v221 = vshrl.u32 %v220, 7
    %223 = vset.pattern.permute.xlu0 %v221
    %224 = vperm.xlu0 %223, %v219
    %v225 = vpop.permute.xlu0 %224
    %v226 = vmul.f32 %v176, %v63
    %v227 = vmul.f32 %v183, %v64
    %v228 = vmul.f32 %v190, %v65
    %v229 = vmul.f32 %v197, %v66
    %v230 = vmul.f32 %v204, %v67
    %v231 = vmul.f32 %v211, %v68
    %v232 = vmul.f32 %v218, %v69
    %v233 = vmul.f32 %v225, %v70
    %v234 = vsel %vm85, %v226, 0.0
    %v235 = vrot.slane %v234, 4
    %v236 = vadd.f32 %v234, %v235
    %v237 = vrot.slane %v236, 2
    %v238 = vadd.f32 %v236, %v237
    %v239 = vrot.slane %v238, 1
    %v240 = vadd.f32 %v238, %v239
    %v241 = vsel %vm85, %v227, 0.0
    %v242 = vrot.slane %v241, 4
    %v243 = vadd.f32 %v241, %v242
    %v244 = vrot.slane %v243, 2
    %v245 = vadd.f32 %v243, %v244
    %v246 = vrot.slane %v245, 1
    %v247 = vadd.f32 %v245, %v246
    %v248 = vsel %vm85, %v228, 0.0
    %v249 = vrot.slane %v248, 4
    %v250 = vadd.f32 %v248, %v249
    %v251 = vrot.slane %v250, 2
    %v252 = vadd.f32 %v250, %v251
    %v253 = vrot.slane %v252, 1
    %v254 = vadd.f32 %v252, %v253
    %v255 = vsel %vm85, %v229, 0.0
    %v256 = vrot.slane %v255, 4
    %v257 = vadd.f32 %v255, %v256
    %v258 = vrot.slane %v257, 2
    %v259 = vadd.f32 %v257, %v258
    %v260 = vrot.slane %v259, 1
    %v261 = vadd.f32 %v259, %v260
    %v262 = vsel %vm85, %v230, 0.0
    %v263 = vrot.slane %v262, 4
    %v264 = vadd.f32 %v262, %v263
    %v265 = vrot.slane %v264, 2
    %v266 = vadd.f32 %v264, %v265
    %v267 = vrot.slane %v266, 1
    %v268 = vadd.f32 %v266, %v267
    %v269 = vsel %vm85, %v231, 0.0
    %v270 = vrot.slane %v269, 4
    %v271 = vadd.f32 %v269, %v270
    %v272 = vrot.slane %v271, 2
    %v273 = vadd.f32 %v271, %v272
    %v274 = vrot.slane %v273, 1
    %v275 = vadd.f32 %v273, %v274
    %v276 = vsel %vm85, %v232, 0.0
    %v277 = vrot.slane %v276, 4
    %v278 = vadd.f32 %v276, %v277
    %v279 = vrot.slane %v278, 2
    %v280 = vadd.f32 %v278, %v279
    %v281 = vrot.slane %v280, 1
    %v282 = vadd.f32 %v280, %v281
    %v283 = vsel %vm85, %v233, 0.0
    %v284 = vrot.slane %v283, 4
    %v285 = vadd.f32 %v283, %v284
    %v286 = vrot.slane %v285, 2
    %v287 = vadd.f32 %v285, %v286
    %v288 = vrot.slane %v287, 1
    %v289 = vadd.f32 %v287, %v288
    %v298 = vsel %vm129, %v247, %v240
    %v299 = vsel %vm131, %v254, %v298
    %v300 = vsel %vm133, %v261, %v299
    %v301 = vsel %vm135, %v268, %v300
    %v302 = vsel %vm137, %v275, %v301
    %v303 = vsel %vm139, %v282, %v302
    %v304 = vsel %vm141, %v289, %v303
    %306 = vst.msk [vmem:[#allocation8] sm:$0xff] %vm85, %v304
    %307 = vst.msk [vmem:[#allocation9] sm:$0xff] %vm145, %v169
    // Predicated region
    $region26: #{tpu_custom_call.1} parent=1 // pred_check
      _
    $region27: #{tpu_custom_call.1} parent=1 // pred_check_branch
      %309 = sbr.rel (0) target = $region29
    $region28: #{tpu_custom_call.1} parent=1 // pred_region
      %311 = vsyncadd [#allocation4], 0
      %s313 = sshll.u32 [#allocation8], 4
      %s314 = int_to_ptr.vmem [resolvable:$true] %s313
      %s315 = sshll.u32 %s3, 4
      %s316 = int_to_ptr.hbm [resolvable:$true] %s315
      %318 = dma.vmem_to_hbm [thread:$0]  %s314, 128, %s316, [#allocation4]
    $region29: #{tpu_custom_call.1} parent=1 // pred_fallthru
      _
    // Predicated region
    $region30: #{tpu_custom_call.1} parent=1 // pred_check
      _
    $region31: #{tpu_custom_call.1} parent=1 // pred_check_branch
      %320 = sbr.rel (0) target = $region33
    $region32: #{tpu_custom_call.1} parent=1 // pred_region
      %322 = vsyncadd [#allocation10], 0
      %s324 = sshll.u32 [#allocation9], 4
      %s325 = int_to_ptr.vmem [resolvable:$true] %s324
      %s326 = sshll.u32 %s4, 4
      %s327 = int_to_ptr.hbm [resolvable:$true] %s326
      %329 = dma.vmem_to_hbm [thread:$0]  %s325, 128, %s327, [#allocation10]
    $region33: #{tpu_custom_call.1} parent=1 // pred_fallthru
      _
    // Predicated region
    $region34: #{tpu_custom_call.1} parent=1 // pred_check
      _
    $region35: #{tpu_custom_call.1} parent=1 // pred_check_branch
      %331 = sbr.rel (0) target = $region37
    $region36: #{tpu_custom_call.1} parent=1 // pred_region
      %333 = dma.done [#allocation4], 128
    $region37: #{tpu_custom_call.1} parent=1 // pred_fallthru
      _
    // Predicated region
    $region38: #{tpu_custom_call.1} parent=1 // pred_check
      _
    $region39: #{tpu_custom_call.1} parent=1 // pred_check_branch
      %335 = sbr.rel (0) target = $region41
    $region40: #{tpu_custom_call.1} parent=1 // pred_region
      %337 = dma.done [#allocation10], 128
    $region41: #{tpu_custom_call.1} parent=1 // pred_fallthru
      _
    %338 = vsyncpa [#allocation3], 1
    %339 = vsyncpa [#allocation6], 1
    %340 = vsyncpa [#allocation4], 1
    %341 = vsyncpa [#allocation10], 1

</llo_original>
